<compile_context>
chip_gen: v7x
topology: tpu7x:2x2x1
jax: 0.10.0
libtpu: 0.0.40
codegen_flags: <defaults>
</compile_context>

<pallas_src>
import functools

import jax
import jax.numpy as jnp
from jax.experimental import pallas as pl
from jax.experimental.pallas import tpu as pltpu


def _round_up(x, m):
    return ((x + m - 1) // m) * m


def _pad2d(x, rows, cols):
    r, c = x.shape
    if r == rows and c == cols:
        return x
    return jnp.pad(x, ((0, rows - r), (0, cols - c)))


# --------------------------------------------------------------------------- #
# Preamble kernels (tiny): linear projections, f32 accumulate
# --------------------------------------------------------------------------- #
def _proj_rows_kernel(x_ref, w_ref, b_ref, o_ref):
    # (TM, E) @ (E, F) + (1, F) -> (TM, F)
    acc = jnp.dot(x_ref[...], w_ref[...], preferred_element_type=jnp.float32)
    o_ref[...] = (acc + b_ref[...]).astype(o_ref.dtype)


def _proj_cols_kernel(wt_ref, xt_ref, b_ref, o_ref):
    # (F, E) @ (E, TN) + (F, 1) -> (F, TN)   (projection emitted pre-transposed)
    acc = jnp.dot(wt_ref[...], xt_ref[...], preferred_element_type=jnp.float32)
    o_ref[...] = (acc + b_ref[...]).astype(o_ref.dtype)


# --------------------------------------------------------------------------- #
# Main kernel: one lane-dense (TM, TN) output tile per grid step
#   prod = zip_tile @ poiT[:, cols]        (standard (1,0) contraction on MXU)
#   out  = exp(lambda) * sigmoid(prod) * vm_tile    (epilogue in f32)
# --------------------------------------------------------------------------- #
def _weights_kernel(scale_ref, zp_ref, pp_ref, vm_ref, out_ref, *,
                    tn, resident, fast):
    if resident:
        # poi_proj^T is fully VMEM-resident; slice the columns for this tile.
        col = pl.multiple_of(pl.program_id(1) * tn, 128)
        rhs = pp_ref[:, pl.ds(col, tn)]
    else:
        rhs = pp_ref[...]
    prod = jnp.dot(zp_ref[...], rhs, preferred_element_type=jnp.float32)
    if fast:
        # sigmoid(x) = 0.5*tanh(0.5x)+0.5 : single EUP op per element
        sig = 0.5 * jnp.tanh(0.5 * prod) + 0.5
    else:
        sig = jax.nn.sigmoid(prod)
    w = (scale_ref[0] * sig) * vm_ref[...].astype(jnp.float32)
    out_ref[...] = w.astype(out_ref.dtype)


# --------------------------------------------------------------------------- #
# Wrapper
# --------------------------------------------------------------------------- #
def weights_encoder(zip_embeds, poi_embeds, visit_matrix,
                    w_zip, b_zip, w_poi, b_poi, lamda,
                    *, tm=512, tn=1024, fast=True, out_dtype=None,
                    poi_resident=None, donate_visit_matrix=False,
                    vmem_budget_bytes=40 * 1024 * 1024):
    """Pallas forward of WeightsEncoder.

    w_zip / w_poi: PyTorch Linear weights (final_sz, embed_sz); biases (final_sz,).
    fast=True: bf16 projections + bf16 output (f32 accumulate/epilogue) -- approximate.
    visit_matrix is streamed in the dtype given (pass bf16 to halve its read traffic).
    """
    zip_embeds = jnp.asarray(zip_embeds, jnp.float32)
    poi_embeds = jnp.asarray(poi_embeds, jnp.float32)
    visit_matrix = jnp.asarray(visit_matrix)
    if visit_matrix.dtype not in (jnp.float32, jnp.bfloat16):
        visit_matrix = visit_matrix.astype(jnp.float32)
    w_zip = jnp.asarray(w_zip, jnp.float32)
    w_poi = jnp.asarray(w_poi, jnp.float32)
    b_zip = jnp.asarray(b_zip, jnp.float32)
    b_poi = jnp.asarray(b_poi, jnp.float32)
    lamda = jnp.asarray(lamda, jnp.float32)

    n_zip, embed_sz = zip_embeds.shape
    n_poi, _ = poi_embeds.shape
    final_sz = w_zip.shape[0]

    if out_dtype is None:
        out_dtype = jnp.bfloat16 if fast else jnp.float32
    proj_dtype = jnp.bfloat16 if fast else jnp.float32

    # ---- contraction dims padded to 128 (zero pad => contributes 0 to dot)
    Ep = _round_up(embed_sz, 128)
    Fp = _round_up(final_sz, 128)

    # ---- tile sizes: as big as the VMEM budget allows
    TM = min(_round_up(tm, 8), _round_up(n_zip, 8))        # multiple of 8
    TN = min(_round_up(tn, 128), _round_up(n_poi, 128))    # multiple of 128 (lane-dense)

    vm_bytes = jnp.dtype(visit_matrix.dtype).itemsize
    out_bytes = jnp.dtype(out_dtype).itemsize
    proj_bytes = jnp.dtype(proj_dtype).itemsize

    def _footprint(tm_, tn_):
        b = 2 * tm_ * tn_ * (vm_bytes + out_bytes)   # vm + out tiles, double-buffered
        b += 2 * tm_ * Fp * proj_bytes               # zip_proj row tile
        b += 2 * Fp * tn_ * proj_bytes               # poi tile (streamed bound)
        b += 2 * tm_ * tn_ * 4                       # f32 prod / epilogue temporaries
        return b

    while _footprint(TM, TN) > vmem_budget_bytes:
        if TN > 128 and TN >= TM:
            TN = max(128, (TN // 2) // 128 * 128)
        elif TM > 8:
            TM = max(8, (TM // 2) // 8 * 8)
        else:
            break

    Mz_pad = _round_up(n_zip, TM)
    Np_pad = _round_up(n_poi, TN)

    # v7x has 2 TensorCores: if a large problem collapsed to a single tile, split N.
    if (Mz_pad // TM) * (Np_pad // TN) == 1 and n_zip * n_poi >= (1 << 19) and TN >= 256:
        TN = max(128, _round_up(TN // 2, 128))
        Np_pad = _round_up(n_poi, TN)

    # ---- pad ONLY the small operands (embeds / weights); visit_matrix untouched
    zip_p = _pad2d(zip_embeds, Mz_pad, Ep)                 # (Mz_pad, Ep)
    poi_t = _pad2d(poi_embeds, Np_pad, Ep).T               # (Ep, Np_pad), tiny
    wz_t = _pad2d(w_zip.T, Ep, Fp)                         # (Ep, Fp): zip does x @ W
    wp = _pad2d(w_poi, Fp, Ep)                             # PyTorch (out, in) layout
    bz = _pad2d(b_zip[None, :], 1, Fp)                     # (1, Fp)
    bp = _pad2d(b_poi[:, None], Fp, 1)                     # (Fp, 1)
    scale = jnp.exp(lamda).astype(jnp.float32).reshape((1,))

    # ---- hoisted projections (tiny, computed once — not per output tile)
    zip_proj = pl.pallas_call(
        _proj_rows_kernel,
        out_shape=jax.ShapeDtypeStruct((Mz_pad, Fp), proj_dtype),
        grid=(Mz_pad // TM,),
        in_specs=[
            pl.BlockSpec((TM, Ep), lambda i: (i, 0)),
            pl.BlockSpec((Ep, Fp), lambda i: (0, 0)),
            pl.BlockSpec((1, Fp), lambda i: (0, 0)),
        ],
        out_specs=pl.BlockSpec((TM, Fp), lambda i: (i, 0)),
        compiler_params=pltpu.CompilerParams(
            dimension_semantics=("parallel",),
            vmem_limit_bytes=32 * 1024 * 1024),
    )(zip_p, wz_t, bz)

    poi_proj_t = pl.pallas_call(                            # emitted already transposed
        _proj_cols_kernel,
        out_shape=jax.ShapeDtypeStruct((Fp, Np_pad), proj_dtype),
        grid=(Np_pad // TN,),
        in_specs=[
            pl.BlockSpec((Fp, Ep), lambda j: (0, 0)),
            pl.BlockSpec((Ep, TN), lambda j: (0, j)),
            pl.BlockSpec((Fp, 1), lambda j: (0, 0)),
        ],
        out_specs=pl.BlockSpec((Fp, TN), lambda j: (0, j)),
        compiler_params=pltpu.CompilerParams(
            dimension_semantics=("parallel",),
            vmem_limit_bytes=32 * 1024 * 1024),
    )(wp, poi_t, bp)

    # ---- keep poi_proj^T fully resident when it is small (no re-streaming)
    poi_total_bytes = Fp * Np_pad * proj_bytes
    if poi_resident is None:
        resident = (poi_total_bytes <= 2 * 1024 * 1024 and
                    _footprint(TM, TN) + 2 * poi_total_bytes <= vmem_budget_bytes)
    else:
        resident = bool(poi_resident)

    if resident:
        poi_spec = pl.BlockSpec((Fp, Np_pad), lambda i, j: (0, 0))   # fetched once
    else:
        poi_spec = pl.BlockSpec((Fp, TN), lambda i, j: (0, j))       # streamed per col tile

    io_aliases = {}
    if donate_visit_matrix and visit_matrix.dtype == jnp.dtype(out_dtype):
        io_aliases = {3: 0}   # reuse visit_matrix's buffer for the output

    grid = (Mz_pad // TM, Np_pad // TN)

    # Ragged grid: visit_matrix / output keep their exact (n_zip, n_poi) shapes.
    # Pallas reads OOB tile regions as garbage (harmless: elementwise epilogue,
    # matmul contraction dim fully valid) and discards OOB tile writes.
    out = pl.pallas_call(
        functools.partial(_weights_kernel, tn=TN, resident=resident, fast=fast),
        out_shape=jax.ShapeDtypeStruct((n_zip, n_poi), out_dtype),
        grid=grid,
        in_specs=[
            pl.BlockSpec(memory_space=pltpu.MemorySpace.SMEM),   # exp(lambda) scalar
            pl.BlockSpec((TM, Fp), lambda i, j: (i, 0)),         # zip_proj row tile
            poi_spec,                                            # poi_proj^T
            pl.BlockSpec((TM, TN), lambda i, j: (i, j)),         # visit_matrix tile
        ],
        out_specs=pl.BlockSpec((TM, TN), lambda i, j: (i, j)),
        input_output_aliases=io_aliases,
        compiler_params=pltpu.CompilerParams(
            dimension_semantics=("parallel", "parallel"),        # megacore-friendly
            vmem_limit_bytes=48 * 1024 * 1024),                  # safe on v7x (64 MiB)
    )(scale, zip_proj, poi_proj_t, visit_matrix)

    return out


# --------------------------------------------------------------------------- #
# Reference + self-test
# --------------------------------------------------------------------------- #
def _reference(zip_embeds, poi_embeds, visit_matrix, w_zip, b_zip, w_poi, b_poi, lamda):
    with jax.default_matmul_precision("highest"):
        z = zip_embeds @ w_zip.T + b_zip
        p = poi_embeds @ w_poi.T + b_poi
        prod = z @ p.T
        return jnp.exp(lamda) * jax.nn.sigmoid(prod) * visit_matrix


if __name__ == "__main__":
    embed_sz, final_sz = 32, 32
    key = jax.random.PRNGKey(0)

    def make_case(case_key, n_zip, n_poi):
        k = jax.random.split(case_key, 7)
        zip_embeds = jax.random.normal(k[0], (n_zip, embed_sz), jnp.float32)
        poi_embeds = jax.random.normal(k[1], (n_poi, embed_sz), jnp.float32)
        visit_matrix = jax.random.uniform(k[2], (n_zip, n_poi), jnp.float32)
        # PyTorch Linear shapes: W=(out,in), b=(out,)
        w_zip = jax.random.normal(k[3], (final_sz, embed_sz), jnp.float32) * 0.1
        b_zip = jax.random.normal(k[4], (final_sz,), jnp.float32) * 0.1
        w_poi = jax.random.normal(k[5], (final_sz, embed_sz), jnp.float32) * 0.1
        b_poi = jax.random.normal(k[6], (final_sz,), jnp.float32) * 0.1
        lamda = jnp.float32(0.1)
        return (zip_embeds, poi_embeds, visit_matrix,
                w_zip, b_zip, w_poi, b_poi, lamda)

    k1, k2, k3 = jax.random.split(key, 3)

    # Case A: tiny module-sized shapes (8 x 16), exact f32 path, single ragged tile.
    args_a = make_case(k1, 8, 16)
    out_a = jax.block_until_ready(weights_encoder(*args_a, fast=False))
    ref_a = _reference(*args_a)
    assert out_a.shape == (8, 16) and out_a.dtype == jnp.float32
    assert jnp.allclose(out_a, ref_a, atol=1e-4, rtol=1e-4), "case A (f32) mismatch"

    # Case B: non-aligned (200 x 300), ragged edges, resident poi; exact + fast paths.
    args_b = make_case(k2, 200, 300)
    ref_b = _reference(*args_b)
    out_b32 = jax.block_until_ready(weights_encoder(*args_b, fast=False))
    assert out_b32.shape == (200, 300)
    assert jnp.allclose(out_b32, ref_b, atol=1e-4, rtol=1e-4), "case B (f32) mismatch"

    out_b16 = jax.block_until_ready(weights_encoder(*args_b, fast=True))
    assert out_b16.dtype == jnp.bfloat16
    assert jnp.allclose(out_b16.astype(jnp.float32), ref_b,
                        atol=2e-2, rtol=2e-2), "case B (bf16) mismatch"

    # Case C: multi-tile grid with ragged edge tiles on both axes, streamed poi path.
    args_c = make_case(k3, 272, 520)
    ref_c = _reference(*args_c)
    out_c = jax.block_until_ready(
        weights_encoder(*args_c, tm=128, tn=256, fast=False, poi_resident=False))
    assert out_c.shape == (272, 520)
    assert jnp.allclose(out_c, ref_c, atol=1e-4, rtol=1e-4), "case C (f32) mismatch"

    print("KERNEL_OK")
</pallas_src>

<mosaic_0001>
module attributes {stable_mosaic.version = 11 : i64} {
  func.func @_proj_rows_kernel(%arg0: i32, %arg1: memref<8x128xf32, #tpu.memory_space<vmem>>, %arg2: memref<128x128xf32, #tpu.memory_space<vmem>>, %arg3: memref<1x128xf32, #tpu.memory_space<vmem>>, %arg4: memref<8x128xf32, #tpu.memory_space<vmem>>) attributes {dimension_semantics = [#tpu.dimension_semantics<parallel>], iteration_bounds = array<i64: 1>, scalar_prefetch = 0 : i64, scratch_operands = 0 : i64, tpu.core_type = #tpu.core_type<tc>, window_params = [{transform_indices = @transform_0, window_bounds = array<i64: 8, 128>}, {pipeline_mode = #tpu.pipeline_mode<synchronous>, transform_indices = @transform_1, window_bounds = array<i64: 128, 128>}, {pipeline_mode = #tpu.pipeline_mode<synchronous>, transform_indices = @transform_2, window_bounds = array<i64: 1, 128>}, {transform_indices = @transform_3, window_bounds = array<i64: 8, 128>}]} {
    %c0 = arith.constant 0 : index
    %c0_0 = arith.constant 0 : index
    %0 = vector.load %arg1[%c0, %c0_0] : memref<8x128xf32, #tpu.memory_space<vmem>>, vector<8x128xf32>
    %c0_1 = arith.constant 0 : index
    %c0_2 = arith.constant 0 : index
    %1 = vector.load %arg2[%c0_1, %c0_2] : memref<128x128xf32, #tpu.memory_space<vmem>>, vector<128x128xf32>
    %cst = arith.constant dense<0.000000e+00> : vector<8x128xf32>
    %2 = tpu.matmul %0, %1, %cst {dimension_numbers = #tpu.dot_dimension_numbers<[1], [0], [0], [1], [0, 0, 1, 1], [], []>} : vector<8x128xf32>, vector<128x128xf32>, vector<8x128xf32> -> vector<8x128xf32>
    %c0_3 = arith.constant 0 : index
    %c0_4 = arith.constant 0 : index
    %3 = vector.load %arg3[%c0_3, %c0_4] : memref<1x128xf32, #tpu.memory_space<vmem>>, vector<1x128xf32>
    %4 = vector.broadcast %3 : vector<1x128xf32> to vector<8x128xf32>
    %5 = arith.addf %2, %4 : vector<8x128xf32>
    %c0_5 = arith.constant 0 : index
    %c0_6 = arith.constant 0 : index
    %6 = vector.load %arg4[%c0_5, %c0_6] : memref<8x128xf32, #tpu.memory_space<vmem>>, vector<8x128xf32>
    tpu.vector_store %arg4[%c0_5, %c0_6], %5 {strides = array<i32>} : memref<8x128xf32, #tpu.memory_space<vmem>>, vector<8x128xf32>,
    return
  }
  func.func @transform_0(%arg0: i32) -> (i32, i32) {
    %c0_i32 = arith.constant 0 : i32
    %c0_i32_0 = arith.constant 0 : i32
    return %arg0, %c0_i32 : i32, i32
  }
  func.func @transform_1(%arg0: i32) -> (i32, i32) {
    %c0_i32 = arith.constant 0 : i32
    %c0_i32_0 = arith.constant 0 : i32
    %c0_i32_1 = arith.constant 0 : i32
    return %c0_i32, %c0_i32_0 : i32, i32
  }
  func.func @transform_2(%arg0: i32) -> (i32, i32) {
    %c0_i32 = arith.constant 0 : i32
    %c0_i32_0 = arith.constant 0 : i32
    %c0_i32_1 = arith.constant 0 : i32
    return %c0_i32, %c0_i32_0 : i32, i32
  }
  func.func @transform_3(%arg0: i32) -> (i32, i32) {
    %c0_i32 = arith.constant 0 : i32
    %c0_i32_0 = arith.constant 0 : i32
    return %arg0, %c0_i32 : i32, i32
  }
}

</mosaic_0001>

<llo_original>
// kernel: tpu_custom_call.1
$region0: #{tpu_custom_call.1}
  #allocation0 [shape = 'u32[]', space=smem, size = 0x4, offset = 0x4, fixed_abs, tag = 'smem constant byte address 0x4 - core index']
  #allocation1 [shape = 'u32[144,128]{1,0:T(1,128)}', space=vmem, size = 0x12000, scoped, tag = 'internal scratch']
  %s0 = inlined_call_operand.hbm [shape: f32[8,128], index: 0, kind: input, shape index: {}]
  %s1 = inlined_call_operand.hbm [shape: f32[128,128], index: 1, kind: input, shape index: {}]
  %s2 = inlined_call_operand.vmem [shape: f32[1,128], index: 2, kind: input, shape index: {}]
  %s3 = inlined_call_operand.hbm [shape: f32[8,128], index: 3, kind: output, shape index: {}]
  %s4 = sld [smem:[#allocation0]]
  $region30: #{tpu_custom_call.1} parent=0
    _
  %s6 = ssub.s32 1, %s4
  %s7 = scalar_select 0, %s6, %s4
  $region1: #{tpu_custom_call.1} parent=0
    #allocation2 [shape = 'u8[4096]{0}', space=vmem, size = 0x1000, scoped, tag = 'input window, operand 0, single buffered']
    #allocation3 [shape = 's32[1]{0}', space=sflag, size = 0x4, scoped, tag = 'scoped memory for tpu_custom_call.1']
    #allocation4 [shape = 's32[1]{0}', space=sflag, size = 0x4, scoped, tag = 'scoped memory for tpu_custom_call.1']
    #allocation5 [shape = 'u8[65536]{0}', space=vmem, size = 0x10000, scoped, tag = 'input window, operand 1, single buffered']
    #allocation6 [shape = 's32[1]{0}', space=sflag, size = 0x4, scoped, tag = 'scoped memory for tpu_custom_call.1']
    #allocation7 [shape = 'u8[4096]{0}', space=vmem, size = 0x1000, scoped, tag = 'output window, operand 0, single buffered']
    %8 = vsyncpa [#allocation3], 0
    %9 = vsyncpa [#allocation6], 0
    %10 = vsyncpa [#allocation4], 0
    // Predicated region
    $region2: #{tpu_custom_call.1} parent=1 // pred_check
      _
    $region3: #{tpu_custom_call.1} parent=1 // pred_check_branch
      %12 = sbr.rel (0) target = $region5
    $region4: #{tpu_custom_call.1} parent=1 // pred_region
      %s14 = ssub.s32 128, 128
      %15 = vsyncadd [#allocation3], %s14
      %s17 = sshll.u32 [#allocation2], 4
      %s18 = int_to_ptr.vmem [resolvable:$true] %s17
      %20 = dma.hbm_to_vmem [thread:$0]  %s0, 128, %s18, [#allocation3]
    $region5: #{tpu_custom_call.1} parent=1 // pred_fallthru
      _
    // Predicated region
    $region6: #{tpu_custom_call.1} parent=1 // pred_check
      _
    $region7: #{tpu_custom_call.1} parent=1 // pred_check_branch
      %22 = sbr.rel (0) target = $region9
    $region8: #{tpu_custom_call.1} parent=1 // pred_region
      %s24 = ssub.s32 2048, 2048
      %25 = vsyncadd [#allocation6], %s24
      %s26 = sshll.u32 [#allocation5], 4
      %s27 = int_to_ptr.vmem [resolvable:$true] %s26
      %32 = dma.hbm_to_vmem [thread:$0]  %s1, 2048, %s27, [#allocation6], 128, 128, 8
    $region9: #{tpu_custom_call.1} parent=1 // pred_fallthru
      _
    // Predicated region
    $region10: #{tpu_custom_call.1} parent=1 // pred_check
      _
    $region11: #{tpu_custom_call.1} parent=1 // pred_check_branch
      %34 = sbr.rel (0) target = $region13
    $region12: #{tpu_custom_call.1} parent=1 // pred_region
      _
    $region13: #{tpu_custom_call.1} parent=1 // pred_fallthru
      _
    // Predicated region
    $region14: #{tpu_custom_call.1} parent=1 // pred_check
      _
    $region15: #{tpu_custom_call.1} parent=1 // pred_check_branch
      %36 = sbr.rel (0) target = $region17
    $region16: #{tpu_custom_call.1} parent=1 // pred_region
      %37 = dma.done [#allocation3], 128
    $region17: #{tpu_custom_call.1} parent=1 // pred_fallthru
      _
    // Predicated region
    $region18: #{tpu_custom_call.1} parent=1 // pred_check
      _
    $region19: #{tpu_custom_call.1} parent=1 // pred_check_branch
      %39 = sbr.rel (0) target = $region21
    $region20: #{tpu_custom_call.1} parent=1 // pred_region
      %40 = dma.done [#allocation6], 2048
    $region21: #{tpu_custom_call.1} parent=1 // pred_fallthru
      _
    %v41 = vld [vmem:[#allocation2] sm:$0xff]
    %v42 = vld [vmem:[#allocation5] sm:$0xff]
    %v43 = vld [vmem:[#allocation5 + $0x8] sm:$0xff]
    %v44 = vld [vmem:[#allocation5 + $0x10] sm:$0xff]
    %v45 = vld [vmem:[#allocation5 + $0x18] sm:$0xff]
    %v46 = vld [vmem:[#allocation5 + $0x20] sm:$0xff]
    %v47 = vld [vmem:[#allocation5 + $0x28] sm:$0xff]
    %v48 = vld [vmem:[#allocation5 + $0x30] sm:$0xff]
    %v49 = vld [vmem:[#allocation5 + $0x38] sm:$0xff]
    %v50 = vld [vmem:[#allocation5 + $0x40] sm:$0xff]
    %v51 = vld [vmem:[#allocation5 + $0x48] sm:$0xff]
    %v52 = vld [vmem:[#allocation5 + $0x50] sm:$0xff]
    %v53 = vld [vmem:[#allocation5 + $0x58] sm:$0xff]
    %v54 = vld [vmem:[#allocation5 + $0x60] sm:$0xff]
    %v55 = vld [vmem:[#allocation5 + $0x68] sm:$0xff]
    %v56 = vld [vmem:[#allocation5 + $0x70] sm:$0xff]
    %v57 = vld [vmem:[#allocation5 + $0x78] sm:$0xff]
    %v58 = vld [vmem:[%s2] sm:$0x1]
    %v60 = vlaneseq
    %v61 = vshrl.u32 %v60, 7
    %v62 = vsub.s32 0, %v61
    %v63 = vrot.slane %v58, %v62
    %65 = vmatprep.subr.mxu0 0.0
    %66 = vmatpush1.msra.mxu0 %v42
    %67 = vmatprep.subr.mxu0 0.0
    %68 = vmatpush1.msra.mxu0 %v43
    %69 = vmatprep.subr.mxu0 0.0
    %70 = vmatpush1.msra.mxu0 %v44
    %71 = vmatprep.subr.mxu0 0.0
    %72 = vmatpush1.msra.mxu0 %v45
    %73 = vmatprep.subr.mxu0 0.0
    %74 = vmatpush1.msra.mxu0 %v46
    %75 = vmatprep.subr.mxu0 0.0
    %76 = vmatpush1.msra.mxu0 %v47
    %77 = vmatprep.subr.mxu0 0.0
    %78 = vmatpush1.msra.mxu0 %v48
    %79 = vmatprep.subr.mxu0 0.0
    %80 = vmatpush1.msra.mxu0 %v49
    %81 = vmatprep.subr.mxu0 0.0
    %82 = vmatpush1.msra.mxu0 %v50
    %83 = vmatprep.subr.mxu0 0.0
    %84 = vmatpush1.msra.mxu0 %v51
    %85 = vmatprep.subr.mxu0 0.0
    %86 = vmatpush1.msra.mxu0 %v52
    %87 = vmatprep.subr.mxu0 0.0
    %88 = vmatpush1.msra.mxu0 %v53
    %89 = vmatprep.subr.mxu0 0.0
    %90 = vmatpush1.msra.mxu0 %v54
    %91 = vmatprep.subr.mxu0 0.0
    %92 = vmatpush1.msra.mxu0 %v55
    %93 = vmatprep.subr.mxu0 0.0
    %94 = vmatpush1.msra.mxu0 %v56
    %95 = vmatprep.subr.mxu0 0.0
    %96 = vmatpush1.msra.mxu0 %v57
    %97 = vmatprep.subr.mxu0 0.0
    %98 = vmatpush1.msra.mxu0 0.0
    %99 = vmatprep.subr.mxu0 0.0
    %100 = vmatpush1.msra.mxu0 0.0
    %101 = vmatprep.subr.mxu0 0.0
    %102 = vmatpush1.msra.mxu0 0.0
    %103 = vmatprep.subr.mxu0 0.0
    %104 = vmatpush1.msra.mxu0 0.0
    %105 = vmatprep.subr.mxu0 0.0
    %106 = vmatpush1.msra.mxu0 0.0
    %107 = vmatprep.subr.mxu0 0.0
    %108 = vmatpush1.msra.mxu0 0.0
    %109 = vmatprep.subr.mxu0 0.0
    %110 = vmatpush1.msra.mxu0 0.0
    %111 = vmatprep.subr.mxu0 0.0
    %112 = vmatpush1.msra.mxu0 0.0
    %113 = vmatprep.subr.mxu0 0.0
    %114 = vmatpush1.msra.mxu0 0.0
    %115 = vmatprep.subr.mxu0 0.0
    %116 = vmatpush1.msra.mxu0 0.0
    %117 = vmatprep.subr.mxu0 0.0
    %118 = vmatpush1.msra.mxu0 0.0
    %119 = vmatprep.subr.mxu0 0.0
    %120 = vmatpush1.msra.mxu0 0.0
    %121 = vmatprep.subr.mxu0 0.0
    %122 = vmatpush1.msra.mxu0 0.0
    %123 = vmatprep.subr.mxu0 0.0
    %124 = vmatpush1.msra.mxu0 0.0
    %125 = vmatprep.subr.mxu0 0.0
    %126 = vmatpush1.msra.mxu0 0.0
    %127 = vmatprep.subr.mxu0 0.0
    %128 = vmatpush1.msra.mxu0 0.0
    %129 = vmatprep.mubr.f32.mxu0 0.0
    %130 = vmatmul.mubr.f32.gmra.mrb[0].mxu0 %v41
    %v131 = vpop.f32.mrb[0].mxu0
    %v132 = vadd.f32 %v63, %v131
    %v133 = vpop.f32.mrb[0].mxu0
    %134 = vdwg.mxu0
    %135 = vst [vmem:[#allocation7] sm:$0xff] %v132
    // Predicated region
    $region22: #{tpu_custom_call.1} parent=1 // pred_check
      _
    $region23: #{tpu_custom_call.1} parent=1 // pred_check_branch
      %137 = sbr.rel (0) target = $region25
    $region24: #{tpu_custom_call.1} parent=1 // pred_region
      %s139 = ssub.s32 128, 128
      %140 = vsyncadd [#allocation4], %s139
      %s142 = sshll.u32 [#allocation7], 4
      %s143 = int_to_ptr.vmem [resolvable:$true] %s142
      %145 = dma.vmem_to_hbm [thread:$0]  %s143, 128, %s3, [#allocation4]
    $region25: #{tpu_custom_call.1} parent=1 // pred_fallthru
      _
    // Predicated region
    $region26: #{tpu_custom_call.1} parent=1 // pred_check
      _
    $region27: #{tpu_custom_call.1} parent=1 // pred_check_branch
      %147 = sbr.rel (0) target = $region29
    $region28: #{tpu_custom_call.1} parent=1 // pred_region
      %148 = dma.done [#allocation4], 128
    $region29: #{tpu_custom_call.1} parent=1 // pred_fallthru
      _
    %149 = vsyncpa [#allocation3], 1
    %150 = vsyncpa [#allocation6], 1
    %151 = vsyncpa [#allocation4], 1

</llo_original>
